<compile_context>
chip_gen: v7x
topology: tpu7x:2x2x1
jax: 0.10.0
libtpu: 0.0.40
codegen_flags: <defaults>
</compile_context>

<pallas_src>
import jax
import jax.numpy as jnp
from jax.experimental import pallas as pl
from jax.experimental.pallas import tpu as pltpu

LRELU_SLOPE = 0.2  # nn.LeakyReLU(0.2)


def _make_conv_kernel(Hin, Win, Cin, Ho, Wo, Cout, kh, kw, act):
    """Builds a kernel computing a VALID, stride-1, kh x kw conv as one fused
    matmul over K = kh*kw*Cin, plus a fused activation.

    act == "lrelu": one output, LeakyReLU(0.2) applied.
    act == "final": two outputs, (raw conv, sigmoid(conv)).
    """

    def gemm(x, w):
        # x: (Hin, Win, Cin) f32; w: (kh*kw*Cin, Cout) f32
        taps = []
        for dy in range(kh):
            for dx in range(kw):
                taps.append(x[dy:dy + Ho, dx:dx + Wo, :])      # unit-stride
        patches = jnp.concatenate(taps, axis=-1)               # (Ho, Wo, K)
        return jax.lax.dot_general(                            # (Ho, Wo, Cout)
            patches, w,
            dimension_numbers=(((2,), (0,)), ((), ())),
            preferred_element_type=jnp.float32)

    if act == "lrelu":
        def kernel(x_ref, w_ref, o_ref):
            y = gemm(x_ref[0].astype(jnp.float32),
                     w_ref[...].astype(jnp.float32))
            o_ref[0] = jnp.maximum(y, LRELU_SLOPE * y).astype(o_ref.dtype)
    else:
        def kernel(x_ref, w_ref, raw_ref, sig_ref):
            y = gemm(x_ref[0].astype(jnp.float32),
                     w_ref[...].astype(jnp.float32))
            raw_ref[0] = y.astype(raw_ref.dtype)
            sig_ref[0] = (1.0 / (1.0 + jnp.exp(-y))).astype(sig_ref.dtype)

    return kernel


def _conv_layer(x_nhwc, w_fused, kh, kw, Ho, Wo, Cout, act):
    """One Pallas call: grid over batch, whole (effective) image per step."""
    N, Hin, Win, Cin = x_nhwc.shape
    K = kh * kw * Cin
    assert w_fused.shape == (K, Cout)

    kernel = _make_conv_kernel(Hin, Win, Cin, Ho, Wo, Cout, kh, kw, act)

    in_specs = [
        pl.BlockSpec((1, Hin, Win, Cin), lambda n: (n, 0, 0, 0)),
        # constant block index -> weight stays VMEM-resident across the grid
        pl.BlockSpec((K, Cout), lambda n: (0, 0)),
    ]
    out_spec = pl.BlockSpec((1, Ho, Wo, Cout), lambda n: (n, 0, 0, 0))

    if act == "lrelu":
        out_shape = jax.ShapeDtypeStruct((N, Ho, Wo, Cout), x_nhwc.dtype)
        out_specs = out_spec
    else:
        out_shape = (jax.ShapeDtypeStruct((N, Ho, Wo, Cout), x_nhwc.dtype),
                     jax.ShapeDtypeStruct((N, Ho, Wo, Cout), x_nhwc.dtype))
        out_specs = (out_spec, out_spec)

    return pl.pallas_call(
        kernel,
        out_shape=out_shape,
        grid_spec=pltpu.PrefetchScalarGridSpec(
            num_scalar_prefetch=0,
            grid=(N,),
            in_specs=in_specs,
            out_specs=out_specs,
        ),
        compiler_params=pltpu.CompilerParams(
            dimension_semantics=("parallel",),
            vmem_limit_bytes=48 * 1024 * 1024,
        ),
    )(x_nhwc, w_fused)


def _prep_stride2(x_nhwc, w_oihw):
    """k=4, s=2, p=1 conv -> pad + space-to-depth(2) + k=2, s=1 conv.

    Returns (x_eff (N,Ho+1,Wo+1,4*Cin), w_fused (16*Cin,Cout), Ho, Wo)."""
    N, H, W, Cin = x_nhwc.shape
    Cout = w_oihw.shape[0]
    assert H % 2 == 0 and W % 2 == 0, "stride-2 path assumes even spatial dims"
    xp = jnp.pad(x_nhwc, ((0, 0), (1, 1), (1, 1), (0, 0)))      # zero pad
    Hs, Ws = (H + 2) // 2, (W + 2) // 2
    xs = xp.reshape(N, Hs, 2, Ws, 2, Cin)
    xs = jnp.transpose(xs, (0, 1, 3, 2, 4, 5)).reshape(N, Hs, Ws, 4 * Cin)
    # weight: [o,c,dy,dx] with dy=2*qy+r, dx=2*qx+s -> flatten (qy,qx,r,s,c)
    wk = jnp.transpose(w_oihw, (2, 3, 1, 0))                    # (4,4,Cin,Cout)
    wk = wk.reshape(2, 2, 2, 2, Cin, Cout)                      # [qy,r,qx,s,c,o]
    wf = jnp.transpose(wk, (0, 2, 1, 3, 4, 5)).reshape(16 * Cin, Cout)
    return xs, wf, H // 2, W // 2


def _prep_stride1(x_nhwc, w_oihw):
    """k=4, s=1, p=1 conv -> pad + k=4 VALID conv."""
    N, H, W, Cin = x_nhwc.shape
    Cout = w_oihw.shape[0]
    xp = jnp.pad(x_nhwc, ((0, 0), (1, 1), (1, 1), (0, 0)))
    wf = jnp.transpose(w_oihw, (2, 3, 1, 0)).reshape(16 * Cin, Cout)
    return xp, wf, H - 1, W - 1


def discriminator_forward(x_nchw, weights, use_sigmoid=True):
    """Forward of the PyTorch Discriminator (use_spectral_norm=True -> no bias).

    x_nchw: (N, Cin, H, W); weights: [w1..w5] in OIHW with k=4.
    Returns (outputs, [conv1, conv2, conv3, conv4, conv5]) in NCHW.
    """
    x = jnp.transpose(x_nchw, (0, 2, 3, 1))          # NHWC internally
    feats = []
    strides = (2, 2, 2, 1)
    for li in range(4):
        if strides[li] == 2:
            xe, wf, Ho, Wo = _prep_stride2(x, weights[li])
            kh = kw = 2
        else:
            xe, wf, Ho, Wo = _prep_stride1(x, weights[li])
            kh = kw = 4
        Cout = weights[li].shape[0]
        x = _conv_layer(xe, wf, kh, kw, Ho, Wo, Cout, "lrelu")
        feats.append(x)

    xe, wf, Ho, Wo = _prep_stride1(x, weights[4])
    conv5, sig = _conv_layer(xe, wf, 4, 4, Ho, Wo, 1, "final")
    feats.append(conv5)

    outputs = sig if use_sigmoid else conv5
    to_nchw = lambda t: jnp.transpose(t, (0, 3, 1, 2))
    return to_nchw(outputs), [to_nchw(f) for f in feats]


def discriminator_ref(x, ws, use_sigmoid=True):
    """Pure-JAX reference mirroring the PyTorch module."""
    def conv(t, w, s):
        return jax.lax.conv_general_dilated(
            t, w, window_strides=(s, s), padding=((1, 1), (1, 1)),
            dimension_numbers=("NCHW", "OIHW", "NCHW"),
            precision=jax.lax.Precision.HIGHEST)

    def lrelu(t):
        return jnp.where(t > 0, t, LRELU_SLOPE * t)

    c1 = lrelu(conv(x, ws[0], 2))
    c2 = lrelu(conv(c1, ws[1], 2))
    c3 = lrelu(conv(c2, ws[2], 2))
    c4 = lrelu(conv(c3, ws[3], 1))
    c5 = conv(c4, ws[4], 1)
    out = jax.nn.sigmoid(c5) if use_sigmoid else c5
    return out, [c1, c2, c3, c4, c5]


if __name__ == "__main__":
    # spatial=32 so conv5 (after three stride-2 convs and two k=4 s=1 convs)
    # has a non-empty output; channel widths 64/128/256/512/1 are fixed by the
    # module, in_channels=4 kept small.
    N, Cin, H, W = 2, 4, 32, 32
    key = jax.random.PRNGKey(0)
    keys = jax.random.split(key, 6)
    x = jax.random.normal(keys[0], (N, Cin, H, W), dtype=jnp.float32)

    chans = [Cin, 64, 128, 256, 512, 1]
    weights = [0.05 * jax.random.normal(keys[i + 1],
                                        (chans[i + 1], chans[i], 4, 4),
                                        dtype=jnp.float32)
               for i in range(5)]

    out, feats = discriminator_forward(x, weights, use_sigmoid=True)
    out = jax.block_until_ready(out)
    feats = [jax.block_until_ready(f) for f in feats]

    ref_out, ref_feats = discriminator_ref(x, weights, use_sigmoid=True)
    assert out.shape == ref_out.shape, (out.shape, ref_out.shape)
    assert jnp.allclose(out, ref_out, rtol=2e-3, atol=2e-3), (
        float(jnp.max(jnp.abs(out - ref_out))))
    for f, rf in zip(feats, ref_feats):
        assert f.shape == rf.shape, (f.shape, rf.shape)
        assert jnp.allclose(f, rf, rtol=2e-3, atol=2e-3), (
            float(jnp.max(jnp.abs(f - rf))))

    print("KERNEL_OK")
</pallas_src>

<mosaic_0001>
module attributes {stable_mosaic.version = 11 : i64} {
  func.func @kernel(%arg0: i32, %arg1: memref<1x17x17x16xf32, #tpu.memory_space<vmem>>, %arg2: memref<64x64xf32, #tpu.memory_space<vmem>>, %arg3: memref<1x16x16x64xf32, #tpu.memory_space<vmem>>) attributes {dimension_semantics = [#tpu.dimension_semantics<parallel>], iteration_bounds = array<i64: 2>, scalar_prefetch = 0 : i64, scratch_operands = 0 : i64, tpu.core_type = #tpu.core_type<tc>, window_params = [{transform_indices = @transform_0, window_bounds = array<i64: 1, 17, 17, 16>}, {pipeline_mode = #tpu.pipeline_mode<synchronous>, transform_indices = @transform_1, window_bounds = array<i64: 64, 64>}, {transform_indices = @transform_2, window_bounds = array<i64: 1, 16, 16, 64>}]} {
    %c0 = arith.constant 0 : index
    %c0_0 = arith.constant 0 : index
    %c0_1 = arith.constant 0 : index
    %c0_2 = arith.constant 0 : index
    %0 = vector.load %arg1[%c0, %c0_0, %c0_1, %c0_2] : memref<1x17x17x16xf32, #tpu.memory_space<vmem>>, vector<1x17x17x16xf32>
    %1 = vector.shape_cast %0 : vector<1x17x17x16xf32> to vector<17x17x16xf32>
    %c0_3 = arith.constant 0 : index
    %c0_4 = arith.constant 0 : index
    %2 = vector.load %arg2[%c0_3, %c0_4] : memref<64x64xf32, #tpu.memory_space<vmem>>, vector<64x64xf32>
    %3 = vector.extract_strided_slice %1 {offsets = [0, 0, 0], sizes = [16, 16, 16], strides = [1, 1, 1]} : vector<17x17x16xf32> to vector<16x16x16xf32>
    %4 = vector.extract_strided_slice %1 {offsets = [0, 1, 0], sizes = [16, 16, 16], strides = [1, 1, 1]} : vector<17x17x16xf32> to vector<16x16x16xf32>
    %5 = vector.extract_strided_slice %1 {offsets = [1, 0, 0], sizes = [16, 16, 16], strides = [1, 1, 1]} : vector<17x17x16xf32> to vector<16x16x16xf32>
    %6 = vector.extract_strided_slice %1 {offsets = [1, 1, 0], sizes = [16, 16, 16], strides = [1, 1, 1]} : vector<17x17x16xf32> to vector<16x16x16xf32>
    %7 = tpu.concatenate %3, %4, %5, %6 in 2 : vector<16x16x16xf32>, vector<16x16x16xf32>, vector<16x16x16xf32>, vector<16x16x16xf32> -> vector<16x16x64xf32>
    %cst = arith.constant dense<0.000000e+00> : vector<16x16x64xf32>
    %8 = tpu.matmul %7, %2, %cst {dimension_numbers = #tpu.dot_dimension_numbers<[2], [0], [0, 1], [1], [0, 0, 0, 1, 1, 1], [], []>} : vector<16x16x64xf32>, vector<64x64xf32>, vector<16x16x64xf32> -> vector<16x16x64xf32>
    %cst_5 = arith.constant 2.000000e-01 : f32
    %9 = vector.broadcast %cst_5 : f32 to vector<16x16x64xf32>
    %10 = arith.mulf %9, %8 : vector<16x16x64xf32>
    %11 = arith.maximumf %8, %10 : vector<16x16x64xf32>
    %c0_6 = arith.constant 0 : index
    %c0_7 = arith.constant 0 : index
    %c0_8 = arith.constant 0 : index
    %c0_9 = arith.constant 0 : index
    %12 = vector.load %arg3[%c0_6, %c0_7, %c0_8, %c0_9] : memref<1x16x16x64xf32, #tpu.memory_space<vmem>>, vector<1x16x16x64xf32>
    %13 = vector.shape_cast %12 : vector<1x16x16x64xf32> to vector<16x16x64xf32>
    %14 = vector.shape_cast %11 : vector<16x16x64xf32> to vector<1x16x16x64xf32>
    tpu.vector_store %arg3[%c0_6, %c0_7, %c0_8, %c0_9], %14 {strides = array<i32>} : memref<1x16x16x64xf32, #tpu.memory_space<vmem>>, vector<1x16x16x64xf32>,
    return
  }
  func.func @transform_0(%arg0: i32) -> (i32, i32, i32, i32) {
    %c0_i32 = arith.constant 0 : i32
    %c0_i32_0 = arith.constant 0 : i32
    %c0_i32_1 = arith.constant 0 : i32
    %c0_i32_2 = arith.constant 0 : i32
    return %arg0, %c0_i32, %c0_i32_0, %c0_i32_1 : i32, i32, i32, i32
  }
  func.func @transform_1(%arg0: i32) -> (i32, i32) {
    %c0_i32 = arith.constant 0 : i32
    %c0_i32_0 = arith.constant 0 : i32
    %c0_i32_1 = arith.constant 0 : i32
    return %c0_i32, %c0_i32_0 : i32, i32
  }
  func.func @transform_2(%arg0: i32) -> (i32, i32, i32, i32) {
    %c0_i32 = arith.constant 0 : i32
    %c0_i32_0 = arith.constant 0 : i32
    %c0_i32_1 = arith.constant 0 : i32
    %c0_i32_2 = arith.constant 0 : i32
    return %arg0, %c0_i32, %c0_i32_0, %c0_i32_1 : i32, i32, i32, i32
  }
}

</mosaic_0001>

<llo_original>
// kernel: tpu_custom_call.1
$region0: #{tpu_custom_call.1}
  #allocation0 [shape = 'u32[]', space=smem, size = 0x4, offset = 0x4, fixed_abs, tag = 'smem constant byte address 0x4 - core index']
  #allocation1 [shape = 'u32[144,128]{1,0:T(1,128)}', space=vmem, size = 0x12000, scoped, tag = 'internal scratch']
  %s0 = inlined_call_operand.vmem [shape: f32[2,17,17,16], index: 0, kind: input, shape index: {}]
  %s1 = inlined_call_operand.vmem [shape: f32[64,64], index: 1, kind: input, shape index: {}]
  %s2 = inlined_call_operand.hbm [shape: f32[2,16,16,64], index: 2, kind: output, shape index: {}]
  %s3 = sld [smem:[#allocation0]]
  $region41: #{tpu_custom_call.1} parent=0
    _
  %s5 = ssub.s32 1, %s3
  %s6 = scalar_select 0, %s5, %s3
  $region1: #{tpu_custom_call.1} parent=0
    #allocation2 [shape = 'u8[262144]{0}', space=vmem, size = 0x40000, scoped, tag = 'output window, operand 0']
    #allocation3 [shape = 's32[2]{0}', space=sflag, size = 0x8, scoped, tag = 'scoped memory for tpu_custom_call.1']
    %7 = vsyncpa [#allocation3], 0
    %s8 = scalar_lea.sflag [#allocation3], 1
    %9 = vsyncpa %s8, 0
    loop: start=0, step=1, limit=4
    $region2: #{tpu_custom_call.1} parent=1 // loop_pre_header
      _
    $region3: #{tpu_custom_call.1} parent=1 // loop_header
      %s11 = sphi 0, %s15
      %p12 = scmp.ge.s32.totalorder %s11, 4
      %s21 = sphi 0, %s23
      %s24 = sphi 0, %s21
      %s25 = sphi 0, %s24
      %s41 = sphi 0, %s25
      %s45 = sphi 0, %s45
      %s47 = sphi 0, %s45
      %s48 = sphi 0, %s47
      %s62 = sphi 0, %s48
      %s68 = sphi 0, %s70
      %s71 = sphi 0, %s68
      %s72 = sphi 0, %s71
      %s88 = sphi 0, %s72
    $region4: #{tpu_custom_call.1} parent=1 // loop_header_branch
      %14 = sbr.rel (%p12) target = $region8
    $region5: #{tpu_custom_call.1} parent=1 // loop_body
      %s16 = ssub.s32 %s11, 1
      %s17 = ssub.s32 %s11, 2
      %s18 = sadd.s32 %s11, 1
      %s19 = ssub.s32 %s11, %s18
      %p20 = scmp.eq.s32.totalorder %s19, 0
      %s22 = sadd.s32 %s21, 1
      %s23 = scalar_select %p20, %s21, %s22
      %p26 = pneg %p20
      %p27 = scmp.eq.s32.totalorder %s11, 1
      %p28 = por %p26, %p27
      %p29 = scmp.ne.s32.totalorder %s21, %s24
      %p30 = scmp.eq.s32.totalorder %s11, 0
      %p31 = por %p29, %p30
      %p32 = scmp.ne.s32.totalorder %s21, %s24
      %p33 = scmp.eq.s32.totalorder %s16, 1
      %p34 = por %p32, %p33
      %p35 = scmp.ne.s32.totalorder %s24, %s25
      %p36 = scmp.eq.s32.totalorder %s16, 0
      %p37 = por %p35, %p36
      %p38 = scmp.ne.s32.totalorder %s24, %s25
      %p39 = scmp.eq.s32.totalorder %s17, 1
      %p40 = por %p38, %p39
      %p42 = scmp.ne.s32.totalorder %s25, %s41
      %p43 = scmp.eq.s32.totalorder %s17, 0
      %p44 = por %p42, %p43
      %s46 = sadd.s32 %s45, 1
      %p49 = scmp.eq.s32.totalorder %s11, 1
      %p50 = scmp.ne.s32.totalorder %s45, %s47
      %p51 = scmp.eq.s32.totalorder %s11, 0
      %p52 = por %p50, %p51
      %p53 = scmp.ne.s32.totalorder %s45, %s47
      %p54 = scmp.eq.s32.totalorder %s16, 1
      %p55 = por %p53, %p54
      %p56 = scmp.ne.s32.totalorder %s47, %s48
      %p57 = scmp.eq.s32.totalorder %s16, 0
      %p58 = por %p56, %p57
      %p59 = scmp.ne.s32.totalorder %s47, %s48
      %p60 = scmp.eq.s32.totalorder %s17, 1
      %p61 = por %p59, %p60
      %p63 = scmp.ne.s32.totalorder %s48, %s62
      %p64 = scmp.eq.s32.totalorder %s17, 0
      %p65 = por %p63, %p64
      %s66 = ssub.s32 %s11, %s18
      %p67 = scmp.eq.s32.totalorder %s66, 0
      %s69 = sadd.s32 %s68, 1
      %s70 = scalar_select %p67, %s68, %s69
      %p73 = pneg %p67
      %p74 = scmp.eq.s32.totalorder %s11, 1
      %p75 = por %p73, %p74
      %p76 = scmp.ne.s32.totalorder %s68, %s71
      %p77 = scmp.eq.s32.totalorder %s11, 0
      %p78 = por %p76, %p77
      %p79 = scmp.ne.s32.totalorder %s68, %s71
      %p80 = scmp.eq.s32.totalorder %s16, 1
      %p81 = por %p79, %p80
      %p82 = scmp.ne.s32.totalorder %s71, %s72
      %p83 = scmp.eq.s32.totalorder %s16, 0
      %p84 = por %p82, %p83
      %p85 = scmp.ne.s32.totalorder %s71, %s72
      %p86 = scmp.eq.s32.totalorder %s17, 1
      %p87 = por %p85, %p86
      %p89 = scmp.ne.s32.totalorder %s72, %s88
      %p90 = scmp.eq.s32.totalorder %s17, 0
      %p91 = por %p89, %p90
      %p92 = scmp.le.s32.totalorder 1, %s11
      %p93 = scmp.lt.s32.totalorder %s11, 3
      %p94 = pnand %p92, %p93
      %p95 = pneg %p94
      // Predicated region
      $region9: #{tpu_custom_call.1} parent=5 // pred_check
        _
      $region10: #{tpu_custom_call.1} parent=5 // pred_check_branch
        %97 = sbr.rel (%p94) target = $region12
      $region11: #{tpu_custom_call.1} parent=5 // pred_region
        %s98 = ssub.s32 %s11, 1
        // Predicated region
        $region13: #{tpu_custom_call.1} parent=11 // pred_check
          %p99 = pneg %p58
        $region14: #{tpu_custom_call.1} parent=11 // pred_check_branch
          %101 = sbr.rel (%p99) target = $region16
        $region15: #{tpu_custom_call.1} parent=11 // pred_region
          _
        $region16: #{tpu_custom_call.1} parent=11 // pred_fallthru
          _
      $region12: #{tpu_custom_call.1} parent=5 // pred_fallthru
        _
      %p102 = scmp.lt.s32.totalorder %s11, 2
      // Predicated region
      $region17: #{tpu_custom_call.1} parent=5 // pred_check
        %p103 = pneg %p102
      $region18: #{tpu_custom_call.1} parent=5 // pred_check_branch
        %105 = sbr.rel (%p103) target = $region20
      $region19: #{tpu_custom_call.1} parent=5 // pred_region
        // Predicated region
        $region21: #{tpu_custom_call.1} parent=19 // pred_check
          %p106 = pneg %p31
        $region22: #{tpu_custom_call.1} parent=19 // pred_check_branch
          %108 = sbr.rel (%p106) target = $region24
        $region23: #{tpu_custom_call.1} parent=19 // pred_region
          %p109 = scmp.lt.s32.totalorder %s11, 1
          %s110 = scalar_select %p109, %s11, 1
          %s111 = smul.addr %s110, 51
          %s112 = smul.addr %s111, 8
          %s113 = scalar_lea.vmem %s0, %s112
        $region24: #{tpu_custom_call.1} parent=19 // pred_fallthru
          _
      $region20: #{tpu_custom_call.1} parent=5 // pred_fallthru
        _
      %p114 = scmp.le.s32.totalorder 1, %s11
      %p115 = scmp.lt.s32.totalorder %s11, 3
      %p116 = pnand %p114, %p115
      %p117 = pneg %p116
      // Predicated region
      $region25: #{tpu_custom_call.1} parent=5 // pred_check
        _
      $region26: #{tpu_custom_call.1} parent=5 // pred_check_branch
        %119 = sbr.rel (%p116) target = $region28
      $region27: #{tpu_custom_call.1} parent=5 // pred_region
        %s120 = ssub.s32 %s11, 1
        %p121 = scmp.lt.s32.totalorder %s16, 1
        %s122 = scalar_select %p121, %s16, 1
        %s123 = smul.addr %s122, 51
        %s124 = smul.addr %s123, 8
        %s125 = scalar_lea.vmem %s0, %s124
        %p126 = pneg %p37
        %p127 = pneg %p34
        %p128 = pneg %p58
        %p129 = pneg %p55
        %p130 = pneg %p84
        %p131 = pneg %p81
        %s132 = sand.u32 %s71, 1
        %s133 = scalar_lea.sflag [#allocation3], %s132
        %s134 = sand.u32 %s71, 1
        %s135 = smul.addr %s134, 256
        %s136 = scalar_lea.vmem [#allocation2], %s135
        %p137 = scmp.lt.s32.totalorder %s16, 1
        %s138 = scalar_select %p137, %s16, 1
        %s139 = smul.addr %s138, 51
        %s140 = smul.addr %s139, 8
        %s141 = scalar_lea.vmem %s0, %s140
        %v142 = vld [vmem:[%s141] sm:$0xff]
        %v143 = vld [vmem:[%s141 + $0x8] sm:$0xff]
        %v144 = vld [vmem:[%s141 + $0x10] sm:$0x1]
        %v145 = vld [vmem:[%s141 + $0x18] sm:$0xff]
        %v146 = vld [vmem:[%s141 + $0x20] sm:$0xff]
        %v147 = vld [vmem:[%s141 + $0x28] sm:$0x1]
        %v148 = vld [vmem:[%s141 + $0x30] sm:$0xff]
        %v149 = vld [vmem:[%s141 + $0x38] sm:$0xff]
        %v150 = vld [vmem:[%s141 + $0x40] sm:$0x1]
        %v151 = vld [vmem:[%s141 + $0x48] sm:$0xff]
        %v152 = vld [vmem:[%s141 + $0x50] sm:$0xff]
        %v153 = vld [vmem:[%s141 + $0x58] sm:$0x1]
        %v154 = vld [vmem:[%s141 + $0x60] sm:$0xff]
        %v155 = vld [vmem:[%s141 + $0x68] sm:$0xff]
        %v156 = vld [vmem:[%s141 + $0x70] sm:$0x1]
        %v157 = vld [vmem:[%s141 + $0x78] sm:$0xff]
        %v158 = vld [vmem:[%s141 + $0x80] sm:$0xff]
        %v159 = vld [vmem:[%s141 + $0x88] sm:$0x1]
        %v160 = vld [vmem:[%s141 + $0x90] sm:$0xff]
        %v161 = vld [vmem:[%s141 + $0x98] sm:$0xff]
        %v162 = vld [vmem:[%s141 + $0xa0] sm:$0x1]
        %v163 = vld [vmem:[%s141 + $0xa8] sm:$0xff]
        %v164 = vld [vmem:[%s141 + $0xb0] sm:$0xff]
        %v165 = vld [vmem:[%s141 + $0xb8] sm:$0x1]
        %v166 = vld [vmem:[%s141 + $0xc0] sm:$0xff]
        %v167 = vld [vmem:[%s141 + $0xc8] sm:$0xff]
        %v168 = vld [vmem:[%s141 + $0xd0] sm:$0x1]
        %v169 = vld [vmem:[%s141 + $0xd8] sm:$0xff]
        %v170 = vld [vmem:[%s141 + $0xe0] sm:$0xff]
        %v171 = vld [vmem:[%s141 + $0xe8] sm:$0x1]
        %v172 = vld [vmem:[%s141 + $0xf0] sm:$0xff]
        %v173 = vld [vmem:[%s141 + $0xf8] sm:$0xff]
        %v174 = vld [vmem:[%s141 + $0x100] sm:$0x1]
        %v175 = vld [vmem:[%s141 + $0x108] sm:$0xff]
        %v176 = vld [vmem:[%s141 + $0x110] sm:$0xff]
        %v177 = vld [vmem:[%s141 + $0x118] sm:$0x1]
        %v178 = vld [vmem:[%s141 + $0x120] sm:$0xff]
        %v179 = vld [vmem:[%s141 + $0x128] sm:$0xff]
        %v180 = vld [vmem:[%s141 + $0x130] sm:$0x1]
        %v181 = vld [vmem:[%s141 + $0x138] sm:$0xff]
        %v182 = vld [vmem:[%s141 + $0x140] sm:$0xff]
        %v183 = vld [vmem:[%s141 + $0x148] sm:$0x1]
        %v184 = vld [vmem:[%s141 + $0x150] sm:$0xff]
        %v185 = vld [vmem:[%s141 + $0x158] sm:$0xff]
        %v186 = vld [vmem:[%s141 + $0x160] sm:$0x1]
        %v187 = vld [vmem:[%s141 + $0x168] sm:$0xff]
        %v188 = vld [vmem:[%s141 + $0x170] sm:$0xff]
        %v189 = vld [vmem:[%s141 + $0x178] sm:$0x1]
        %v190 = vld [vmem:[%s141 + $0x180] sm:$0xff]
        %v191 = vld [vmem:[%s141 + $0x188] sm:$0xff]
        %v192 = vld [vmem:[%s141 + $0x190] sm:$0x1]
        %v193 = vld [vmem:[%s1] sm:$0xff]
        %v194 = vld [vmem:[%s1 + $0x8] sm:$0xff]
        %v195 = vld [vmem:[%s1 + $0x10] sm:$0xff]
        %v196 = vld [vmem:[%s1 + $0x18] sm:$0xff]
        %v197 = vld [vmem:[%s1 + $0x20] sm:$0xff]
        %v198 = vld [vmem:[%s1 + $0x28] sm:$0xff]
        %v199 = vld [vmem:[%s1 + $0x30] sm:$0xff]
        %v200 = vld [vmem:[%s1 + $0x38] sm:$0xff]
        %vm249 = vcmask 1046528
        %v250 = vrot.slane %v142, 1
        %v251 = vrot.slane %v143, 1
        %v252 = vsel %vm249, %v250, %v251
        %v253 = vrot.slane %v144, 1
        %v254 = vsel %vm249, %v251, %v253
        %v255 = vrot.slane %v145, 1
        %v256 = vrot.slane %v146, 1
        %v257 = vsel %vm249, %v255, %v256
        %v258 = vrot.slane %v147, 1
        %v259 = vsel %vm249, %v256, %v258
        %v260 = vrot.slane %v148, 1
        %v261 = vrot.slane %v149, 1
        %v262 = vsel %vm249, %v260, %v261
        %v263 = vrot.slane %v150, 1
        %v264 = vsel %vm249, %v261, %v263
        %v265 = vrot.slane %v151, 1
        %v266 = vrot.slane %v152, 1
        %v267 = vsel %vm249, %v265, %v266
        %v268 = vrot.slane %v153, 1
        %v269 = vsel %vm249, %v266, %v268
        %v270 = vrot.slane %v154, 1
        %v271 = vrot.slane %v155, 1
        %v272 = vsel %vm249, %v270, %v271
        %v273 = vrot.slane %v156, 1
        %v274 = vsel %vm249, %v271, %v273
        %v275 = vrot.slane %v157, 1
        %v276 = vrot.slane %v158, 1
        %v277 = vsel %vm249, %v275, %v276
        %v278 = vrot.slane %v159, 1
        %v279 = vsel %vm249, %v276, %v278
        %v280 = vrot.slane %v160, 1
        %v281 = vrot.slane %v161, 1
        %v282 = vsel %vm249, %v280, %v281
        %v283 = vrot.slane %v162, 1
        %v284 = vsel %vm249, %v281, %v283
        %v285 = vrot.slane %v163, 1
        %v286 = vrot.slane %v164, 1
        %v287 = vsel %vm249, %v285, %v286
        %v288 = vrot.slane %v165, 1
        %v289 = vsel %vm249, %v286, %v288
        %v290 = vrot.slane %v166, 1
        %v291 = vrot.slane %v167, 1
        %v292 = vsel %vm249, %v290, %v291
        %v293 = vrot.slane %v168, 1
        %v294 = vsel %vm249, %v291, %v293
        %v295 = vrot.slane %v169, 1
        %v296 = vrot.slane %v170, 1
        %v297 = vsel %vm249, %v295, %v296
        %v298 = vrot.slane %v171, 1
        %v299 = vsel %vm249, %v296, %v298
        %v300 = vrot.slane %v172, 1
        %v301 = vrot.slane %v173, 1
        %v302 = vsel %vm249, %v300, %v301
        %v303 = vrot.slane %v174, 1
        %v304 = vsel %vm249, %v301, %v303
        %v305 = vrot.slane %v175, 1
        %v306 = vrot.slane %v176, 1
        %v307 = vsel %vm249, %v305, %v306
        %v308 = vrot.slane %v177, 1
        %v309 = vsel %vm249, %v306, %v308
        %v310 = vrot.slane %v178, 1
        %v311 = vrot.slane %v179, 1
        %v312 = vsel %vm249, %v310, %v311
        %v313 = vrot.slane %v180, 1
        %v314 = vsel %vm249, %v311, %v313
        %v315 = vrot.slane %v181, 1
        %v316 = vrot.slane %v182, 1
        %v317 = vsel %vm249, %v315, %v316
        %v318 = vrot.slane %v183, 1
        %v319 = vsel %vm249, %v316, %v318
        %v320 = vrot.slane %v184, 1
        %v321 = vrot.slane %v185, 1
        %v322 = vsel %vm249, %v320, %v321
        %v323 = vrot.slane %v186, 1
        %v324 = vsel %vm249, %v321, %v323
        %v325 = vrot.slane %v187, 1
        %v326 = vrot.slane %v188, 1
        %v327 = vsel %vm249, %v325, %v326
        %v328 = vrot.slane %v189, 1
        %v329 = vsel %vm249, %v326, %v328
        %330 = vrot.lane.b32.xlu0 %v252, 16
        %v331 = vpop.permute.xlu0 %330
        %332 = vrot.lane.b32.xlu0 %v254, 16
        %v333 = vpop.permute.xlu0 %332
        %334 = vrot.lane.b32.xlu0 %v257, 16
        %v335 = vpop.permute.xlu0 %334
        %336 = vrot.lane.b32.xlu0 %v259, 16
        %v337 = vpop.permute.xlu0 %336
        %338 = vrot.lane.b32.xlu0 %v262, 16
        %v339 = vpop.permute.xlu0 %338
        %340 = vrot.lane.b32.xlu0 %v264, 16
        %v341 = vpop.permute.xlu0 %340
        %342 = vrot.lane.b32.xlu0 %v267, 16
        %v343 = vpop.permute.xlu0 %342
        %344 = vrot.lane.b32.xlu0 %v269, 16
        %v345 = vpop.permute.xlu0 %344
        %346 = vrot.lane.b32.xlu0 %v272, 16
        %v347 = vpop.permute.xlu0 %346
        %348 = vrot.lane.b32.xlu0 %v274, 16
        %v349 = vpop.permute.xlu0 %348
        %350 = vrot.lane.b32.xlu0 %v277, 16
        %v351 = vpop.permute.xlu0 %350
        %352 = vrot.lane.b32.xlu0 %v279, 16
        %v353 = vpop.permute.xlu0 %352
        %354 = vrot.lane.b32.xlu0 %v282, 16
        %v355 = vpop.permute.xlu0 %354
        %356 = vrot.lane.b32.xlu0 %v284, 16
        %v357 = vpop.permute.xlu0 %356
        %358 = vrot.lane.b32.xlu0 %v287, 16
        %v359 = vpop.permute.xlu0 %358
        %360 = vrot.lane.b32.xlu0 %v289, 16
        %v361 = vpop.permute.xlu0 %360
        %362 = vrot.lane.b32.xlu0 %v292, 16
        %v363 = vpop.permute.xlu0 %362
        %364 = vrot.lane.b32.xlu0 %v294, 16
        %v365 = vpop.permute.xlu0 %364
        %366 = vrot.lane.b32.xlu0 %v297, 16
        %v367 = vpop.permute.xlu0 %366
        %368 = vrot.lane.b32.xlu0 %v299, 16
        %v369 = vpop.permute.xlu0 %368
        %370 = vrot.lane.b32.xlu0 %v302, 16
        %v371 = vpop.permute.xlu0 %370
        %372 = vrot.lane.b32.xlu0 %v304, 16
        %v373 = vpop.permute.xlu0 %372
        %374 = vrot.lane.b32.xlu0 %v307, 16
        %v375 = vpop.permute.xlu0 %374
        %376 = vrot.lane.b32.xlu0 %v309, 16
        %v377 = vpop.permute.xlu0 %376
        %378 = vrot.lane.b32.xlu0 %v312, 16
        %v379 = vpop.permute.xlu0 %378
        %380 = vrot.lane.b32.xlu0 %v314, 16
        %v381 = vpop.permute.xlu0 %380
        %382 = vrot.lane.b32.xlu0 %v317, 16
        %v383 = vpop.permute.xlu0 %382
        %384 = vrot.lane.b32.xlu0 %v319, 16
        %v385 = vpop.permute.xlu0 %384
        %386 = vrot.lane.b32.xlu0 %v322, 16
        %v387 = vpop.permute.xlu0 %386
        %388 = vrot.lane.b32.xlu0 %v324, 16
        %v389 = vpop.permute.xlu0 %388
        %390 = vrot.lane.b32.xlu0 %v327, 16
        %v391 = vpop.permute.xlu0 %390
        %392 = vrot.lane.b32.xlu0 %v329, 16
        %v393 = vpop.permute.xlu0 %392
        %428 = vrot.lane.b32.xlu0 %v145, 32
        %v429 = vpop.permute.xlu0 %428
        %430 = vrot.lane.b32.xlu0 %v146, 32
        %v431 = vpop.permute.xlu0 %430
        %432 = vrot.lane.b32.xlu0 %v148, 32
        %v433 = vpop.permute.xlu0 %432
        %434 = vrot.lane.b32.xlu0 %v149, 32
        %v435 = vpop.permute.xlu0 %434
        %436 = vrot.lane.b32.xlu0 %v151, 32
        %v437 = vpop.permute.xlu0 %436
        %438 = vrot.lane.b32.xlu0 %v152, 32
        %v439 = vpop.permute.xlu0 %438
        %440 = vrot.lane.b32.xlu0 %v154, 32
        %v441 = vpop.permute.xlu0 %440
        %442 = vrot.lane.b32.xlu0 %v155, 32
        %v443 = vpop.permute.xlu0 %442
        %444 = vrot.lane.b32.xlu0 %v157, 32
        %v445 = vpop.permute.xlu0 %444
        %446 = vrot.lane.b32.xlu0 %v158, 32
        %v447 = vpop.permute.xlu0 %446
        %448 = vrot.lane.b32.xlu0 %v160, 32
        %v449 = vpop.permute.xlu0 %448
        %450 = vrot.lane.b32.xlu0 %v161, 32
        %v451 = vpop.permute.xlu0 %450
        %452 = vrot.lane.b32.xlu0 %v163, 32
        %v453 = vpop.permute.xlu0 %452
        %454 = vrot.lane.b32.xlu0 %v164, 32
        %v455 = vpop.permute.xlu0 %454
        %456 = vrot.lane.b32.xlu0 %v166, 32
        %v457 = vpop.permute.xlu0 %456
        %458 = vrot.lane.b32.xlu0 %v167, 32
        %v459 = vpop.permute.xlu0 %458
        %460 = vrot.lane.b32.xlu0 %v169, 32
        %v461 = vpop.permute.xlu0 %460
        %462 = vrot.lane.b32.xlu0 %v170, 32
        %v463 = vpop.permute.xlu0 %462
        %464 = vrot.lane.b32.xlu0 %v172, 32
        %v465 = vpop.permute.xlu0 %464
        %466 = vrot.lane.b32.xlu0 %v173, 32
        %v467 = vpop.permute.xlu0 %466
        %468 = vrot.lane.b32.xlu0 %v175, 32
        %v469 = vpop.permute.xlu0 %468
        %470 = vrot.lane.b32.xlu0 %v176, 32
        %v471 = vpop.permute.xlu0 %470
        %472 = vrot.lane.b32.xlu0 %v178, 32
        %v473 = vpop.permute.xlu0 %472
        %474 = vrot.lane.b32.xlu0 %v179, 32
        %v475 = vpop.permute.xlu0 %474
        %476 = vrot.lane.b32.xlu0 %v181, 32
        %v477 = vpop.permute.xlu0 %476
        %478 = vrot.lane.b32.xlu0 %v182, 32
        %v479 = vpop.permute.xlu0 %478
        %480 = vrot.lane.b32.xlu0 %v184, 32
        %v481 = vpop.permute.xlu0 %480
        %482 = vrot.lane.b32.xlu0 %v185, 32
        %v483 = vpop.permute.xlu0 %482
        %484 = vrot.lane.b32.xlu0 %v187, 32
        %v485 = vpop.permute.xlu0 %484
        %486 = vrot.lane.b32.xlu0 %v188, 32
        %v487 = vpop.permute.xlu0 %486
        %488 = vrot.lane.b32.xlu0 %v190, 32
        %v489 = vpop.permute.xlu0 %488
        %490 = vrot.lane.b32.xlu0 %v191, 32
        %v491 = vpop.permute.xlu0 %490
        %v525 = vrot.slane %v190, 1
        %v526 = vrot.slane %v191, 1
        %v527 = vsel %vm249, %v525, %v526
        %v528 = vrot.slane %v192, 1
        %v529 = vsel %vm249, %v526, %v528
        %530 = vrot.lane.b32.xlu0 %v257, 48
        %v531 = vpop.permute.xlu0 %530
        %532 = vrot.lane.b32.xlu0 %v259, 48
        %v533 = vpop.permute.xlu0 %532
        %534 = vrot.lane.b32.xlu0 %v262, 48
        %v535 = vpop.permute.xlu0 %534
        %536 = vrot.lane.b32.xlu0 %v264, 48
        %v537 = vpop.permute.xlu0 %536
        %538 = vrot.lane.b32.xlu0 %v267, 48
        %v539 = vpop.permute.xlu0 %538
        %540 = vrot.lane.b32.xlu0 %v269, 48
        %v541 = vpop.permute.xlu0 %540
        %542 = vrot.lane.b32.xlu0 %v272, 48
        %v543 = vpop.permute.xlu0 %542
        %544 = vrot.lane.b32.xlu0 %v274, 48
        %v545 = vpop.permute.xlu0 %544
        %546 = vrot.lane.b32.xlu0 %v277, 48
        %v547 = vpop.permute.xlu0 %546
        %548 = vrot.lane.b32.xlu0 %v279, 48
        %v549 = vpop.permute.xlu0 %548
        %550 = vrot.lane.b32.xlu0 %v282, 48
        %v551 = vpop.permute.xlu0 %550
        %552 = vrot.lane.b32.xlu0 %v284, 48
        %v553 = vpop.permute.xlu0 %552
        %554 = vrot.lane.b32.xlu0 %v287, 48
        %v555 = vpop.permute.xlu0 %554
        %556 = vrot.lane.b32.xlu0 %v289, 48
        %v557 = vpop.permute.xlu0 %556
        %558 = vrot.lane.b32.xlu0 %v292, 48
        %v559 = vpop.permute.xlu0 %558
        %560 = vrot.lane.b32.xlu0 %v294, 48
        %v561 = vpop.permute.xlu0 %560
        %562 = vrot.lane.b32.xlu0 %v297, 48
        %v563 = vpop.permute.xlu0 %562
        %564 = vrot.lane.b32.xlu0 %v299, 48
        %v565 = vpop.permute.xlu0 %564
        %566 = vrot.lane.b32.xlu0 %v302, 48
        %v567 = vpop.permute.xlu0 %566
        %568 = vrot.lane.b32.xlu0 %v304, 48
        %v569 = vpop.permute.xlu0 %568
        %570 = vrot.lane.b32.xlu0 %v307, 48
        %v571 = vpop.permute.xlu0 %570
        %572 = vrot.lane.b32.xlu0 %v309, 48
        %v573 = vpop.permute.xlu0 %572
        %574 = vrot.lane.b32.xlu0 %v312, 48
        %v575 = vpop.permute.xlu0 %574
        %576 = vrot.lane.b32.xlu0 %v314, 48
        %v577 = vpop.permute.xlu0 %576
        %578 = vrot.lane.b32.xlu0 %v317, 48
        %v579 = vpop.permute.xlu0 %578
        %580 = vrot.lane.b32.xlu0 %v319, 48
        %v581 = vpop.permute.xlu0 %580
        %582 = vrot.lane.b32.xlu0 %v322, 48
        %v583 = vpop.permute.xlu0 %582
        %584 = vrot.lane.b32.xlu0 %v324, 48
        %v585 = vpop.permute.xlu0 %584
        %586 = vrot.lane.b32.xlu0 %v327, 48
        %v587 = vpop.permute.xlu0 %586
        %588 = vrot.lane.b32.xlu0 %v329, 48
        %v589 = vpop.permute.xlu0 %588
        %590 = vrot.lane.b32.xlu0 %v527, 48
        %v591 = vpop.permute.xlu0 %590
        %592 = vrot.lane.b32.xlu0 %v529, 48
        %v593 = vpop.permute.xlu0 %592
        %vm626 = vcmask 130048
        %v627 = vsel %vm626, %v142, %v331
        %v628 = vsel %vm626, %v143, %v333
        %v629 = vsel %vm626, %v145, %v335
        %v630 = vsel %vm626, %v146, %v337
        %v631 = vsel %vm626, %v148, %v339
        %v632 = vsel %vm626, %v149, %v341
        %v633 = vsel %vm626, %v151, %v343
        %v634 = vsel %vm626, %v152, %v345
        %v635 = vsel %vm626, %v154, %v347
        %v636 = vsel %vm626, %v155, %v349
        %v637 = vsel %vm626, %v157, %v351
        %v638 = vsel %vm626, %v158, %v353
        %v639 = vsel %vm626, %v160, %v355
        %v640 = vsel %vm626, %v161, %v357
        %v641 = vsel %vm626, %v163, %v359
        %v642 = vsel %vm626, %v164, %v361
        %v643 = vsel %vm626, %v166, %v363
        %v644 = vsel %vm626, %v167, %v365
        %v645 = vsel %vm626, %v169, %v367
        %v646 = vsel %vm626, %v170, %v369
        %v647 = vsel %vm626, %v172, %v371
        %v648 = vsel %vm626, %v173, %v373
        %v649 = vsel %vm626, %v175, %v375
        %v650 = vsel %vm626, %v176, %v377
        %v651 = vsel %vm626, %v178, %v379
        %v652 = vsel %vm626, %v179, %v381
        %v653 = vsel %vm626, %v181, %v383
        %v654 = vsel %vm626, %v182, %v385
        %v655 = vsel %vm626, %v184, %v387
        %v656 = vsel %vm626, %v185, %v389
        %v657 = vsel %vm626, %v187, %v391
        %v658 = vsel %vm626, %v188, %v393
        %vm659 = vcmask 261120
        %v660 = vsel %vm659, %v627, %v429
        %v661 = vsel %vm659, %v628, %v431
        %v662 = vsel %vm659, %v629, %v433
        %v663 = vsel %vm659, %v630, %v435
        %v664 = vsel %vm659, %v631, %v437
        %v665 = vsel %vm659, %v632, %v439
        %v666 = vsel %vm659, %v633, %v441
        %v667 = vsel %vm659, %v634, %v443
        %v668 = vsel %vm659, %v635, %v445
        %v669 = vsel %vm659, %v636, %v447
        %v670 = vsel %vm659, %v637, %v449
        %v671 = vsel %vm659, %v638, %v451
        %v672 = vsel %vm659, %v639, %v453
        %v673 = vsel %vm659, %v640, %v455
        %v674 = vsel %vm659, %v641, %v457
        %v675 = vsel %vm659, %v642, %v459
        %v676 = vsel %vm659, %v643, %v461
        %v677 = vsel %vm659, %v644, %v463
        %v678 = vsel %vm659, %v645, %v465
        %v679 = vsel %vm659, %v646, %v467
        %v680 = vsel %vm659, %v647, %v469
        %v681 = vsel %vm659, %v648, %v471
        %v682 = vsel %vm659, %v649, %v473
        %v683 = vsel %vm659, %v650, %v475
        %v684 = vsel %vm659, %v651, %v477
        %v685 = vsel %vm659, %v652, %v479
        %v686 = vsel %vm659, %v653, %v481
        %v687 = vsel %vm659, %v654, %v483
        %v688 = vsel %vm659, %v655, %v485
        %v689 = vsel %vm659, %v656, %v487
        %v690 = vsel %vm659, %v657, %v489
        %v691 = vsel %vm659, %v658, %v491
        %vm692 = vcmask 392192
        %v693 = vsel %vm692, %v660, %v531
        %v694 = vsel %vm692, %v661, %v533
        %v695 = vsel %vm692, %v662, %v535
        %v696 = vsel %vm692, %v663, %v537
        %v697 = vsel %vm692, %v664, %v539
        %v698 = vsel %vm692, %v665, %v541
        %v699 = vsel %vm692, %v666, %v543
        %v700 = vsel %vm692, %v667, %v545
        %v701 = vsel %vm692, %v668, %v547
        %v702 = vsel %vm692, %v669, %v549
        %v703 = vsel %vm692, %v670, %v551
        %v704 = vsel %vm692, %v671, %v553
        %v705 = vsel %vm692, %v672, %v555
        %v706 = vsel %vm692, %v673, %v557
        %v707 = vsel %vm692, %v674, %v559
        %v708 = vsel %vm692, %v675, %v561
        %v709 = vsel %vm692, %v676, %v563
        %v710 = vsel %vm692, %v677, %v565
        %v711 = vsel %vm692, %v678, %v567
        %v712 = vsel %vm692, %v679, %v569
        %v713 = vsel %vm692, %v680, %v571
        %v714 = vsel %vm692, %v681, %v573
        %v715 = vsel %vm692, %v682, %v575
        %v716 = vsel %vm692, %v683, %v577
        %v717 = vsel %vm692, %v684, %v579
        %v718 = vsel %vm692, %v685, %v581
        %v719 = vsel %vm692, %v686, %v583
        %v720 = vsel %vm692, %v687, %v585
        %v721 = vsel %vm692, %v688, %v587
        %v722 = vsel %vm692, %v689, %v589
        %v723 = vsel %vm692, %v690, %v591
        %v724 = vsel %vm692, %v691, %v593
        %vm725 = vcmask 523264
        %v727 = vsel %vm725, %v693, 0
        %v730 = vsel %vm725, %v694, 0
        %v733 = vsel %vm725, %v695, 0
        %v736 = vsel %vm725, %v696, 0
        %v739 = vsel %vm725, %v697, 0
        %v742 = vsel %vm725, %v698, 0
        %v745 = vsel %vm725, %v699, 0
        %v748 = vsel %vm725, %v700, 0
        %v751 = vsel %vm725, %v701, 0
        %v754 = vsel %vm725, %v702, 0
        %v757 = vsel %vm725, %v703, 0
        %v760 = vsel %vm725, %v704, 0
        %v763 = vsel %vm725, %v705, 0
        %v766 = vsel %vm725, %v706, 0
        %v769 = vsel %vm725, %v707, 0
        %v772 = vsel %vm725, %v708, 0
        %v775 = vsel %vm725, %v709, 0
        %v778 = vsel %vm725, %v710, 0
        %v781 = vsel %vm725, %v711, 0
        %v784 = vsel %vm725, %v712, 0
        %v787 = vsel %vm725, %v713, 0
        %v790 = vsel %vm725, %v714, 0
        %v793 = vsel %vm725, %v715, 0
        %v796 = vsel %vm725, %v716, 0
        %v799 = vsel %vm725, %v717, 0
        %v802 = vsel %vm725, %v718, 0
        %v805 = vsel %vm725, %v719, 0
        %v808 = vsel %vm725, %v720, 0
        %v811 = vsel %vm725, %v721, 0
        %v814 = vsel %vm725, %v722, 0
        %v817 = vsel %vm725, %v723, 0
        %v820 = vsel %vm725, %v724, 0
        %822 = vmatprep.subr.mxu0 0.0
        %823 = vmatpush1.msra.mxu0 %v193
        %824 = vmatprep.subr.mxu0 0.0
        %825 = vmatpush1.msra.mxu0 %v194
        %826 = vmatprep.subr.mxu0 0.0
        %827 = vmatpush1.msra.mxu0 %v195
        %828 = vmatprep.subr.mxu0 0.0
        %829 = vmatpush1.msra.mxu0 %v196
        %830 = vmatprep.subr.mxu0 0.0
        %831 = vmatpush1.msra.mxu0 %v197
        %832 = vmatprep.subr.mxu0 0.0
        %833 = vmatpush1.msra.mxu0 %v198
        %834 = vmatprep.subr.mxu0 0.0
        %835 = vmatpush1.msra.mxu0 %v199
        %836 = vmatprep.subr.mxu0 0.0
        %837 = vmatpush1.msra.mxu0 %v200
        %838 = vmatprep.subr.mxu0 0.0
        %839 = vmatpush1.msra.mxu0 0.0
        %840 = vmatprep.subr.mxu0 0.0
        %841 = vmatpush1.msra.mxu0 0.0
        %842 = vmatprep.subr.mxu0 0.0
        %843 = vmatpush1.msra.mxu0 0.0
        %844 = vmatprep.subr.mxu0 0.0
        %845 = vmatpush1.msra.mxu0 0.0
        %846 = vmatprep.subr.mxu0 0.0
        %847 = vmatpush1.msra.mxu0 0.0
        %848 = vmatprep.subr.mxu0 0.0
        %849 = vmatpush1.msra.mxu0 0.0
        %850 = vmatprep.subr.mxu0 0.0
        %851 = vmatpush1.msra.mxu0 0.0
        %852 = vmatprep.subr.mxu0 0.0
        %853 = vmatpush1.msra.mxu0 0.0
        %854 = vmatprep.subr.mxu0 0.0
        %855 = vmatpush1.msra.mxu0 0.0
        %856 = vmatprep.subr.mxu0 0.0
        %857 = vmatpush1.msra.mxu0 0.0
        %858 = vmatprep.subr.mxu0 0.0
        %859 = vmatpush1.msra.mxu0 0.0
        %860 = vmatprep.subr.mxu0 0.0
        %861 = vmatpush1.msra.mxu0 0.0
        %862 = vmatprep.subr.mxu0 0.0
        %863 = vmatpush1.msra.mxu0 0.0
        %864 = vmatprep.subr.mxu0 0.0
        %865 = vmatpush1.msra.mxu0 0.0
        %866 = vmatprep.subr.mxu0 0.0
        %867 = vmatpush1.msra.mxu0 0.0
        %868 = vmatprep.subr.mxu0 0.0
        %869 = vmatpush1.msra.mxu0 0.0
        %870 = vmatprep.subr.mxu0 0.0
        %871 = vmatpush1.msra.mxu0 0.0
        %872 = vmatprep.subr.mxu0 0.0
        %873 = vmatpush1.msra.mxu0 0.0
        %874 = vmatprep.subr.mxu0 0.0
        %875 = vmatpush1.msra.mxu0 0.0
        %876 = vmatprep.subr.mxu0 0.0
        %877 = vmatpush1.msra.mxu0 0.0
        %878 = vmatprep.subr.mxu0 0.0
        %879 = vmatpush1.msra.mxu0 0.0
        %880 = vmatprep.subr.mxu0 0.0
        %881 = vmatpush1.msra.mxu0 0.0
        %882 = vmatprep.subr.mxu0 0.0
        %883 = vmatpush1.msra.mxu0 0.0
        %884 = vmatprep.subr.mxu0 0.0
        %885 = vmatpush1.msra.mxu0 0.0
        %886 = vmatprep.mubr.f32.mxu0 0.0
        %887 = vmatmul.mubr.f32.gmra.mrb[0].mxu0 %v727
        %v888 = vpop.f32.mrb[0].mxu0
        %v889 = vadd.f32 0.0, %v888
        %v890 = vpop.f32.mrb[0].mxu0
        %891 = vmatprep.mubr.f32.mxu0 0.0
        %892 = vmatmul.mubr.f32.gmra.mrb[0].mxu0 %v730
        %v893 = vpop.f32.mrb[0].mxu0
        %v894 = vadd.f32 0.0, %v893
        %v895 = vpop.f32.mrb[0].mxu0
        %896 = vmatprep.mubr.f32.mxu0 0.0
        %897 = vmatmul.mubr.f32.gmra.mrb[0].mxu0 %v733
        %v898 = vpop.f32.mrb[0].mxu0
        %v899 = vadd.f32 0.0, %v898
        %v900 = vpop.f32.mrb[0].mxu0
        %901 = vmatprep.mubr.f32.mxu0 0.0
        %902 = vmatmul.mubr.f32.gmra.mrb[0].mxu0 %v736
        %v903 = vpop.f32.mrb[0].mxu0
        %v904 = vadd.f32 0.0, %v903
        %v905 = vpop.f32.mrb[0].mxu0
        %906 = vmatprep.mubr.f32.mxu0 0.0
        %907 = vmatmul.mubr.f32.gmra.mrb[0].mxu0 %v739
        %v908 = vpop.f32.mrb[0].mxu0
        %v909 = vadd.f32 0.0, %v908
        %v910 = vpop.f32.mrb[0].mxu0
        %911 = vmatprep.mubr.f32.mxu0 0.0
        %912 = vmatmul.mubr.f32.gmra.mrb[0].mxu0 %v742
        %v913 = vpop.f32.mrb[0].mxu0
        %v914 = vadd.f32 0.0, %v913
        %v915 = vpop.f32.mrb[0].mxu0
        %916 = vmatprep.mubr.f32.mxu0 0.0
        %917 = vmatmul.mubr.f32.gmra.mrb[0].mxu0 %v745
        %v918 = vpop.f32.mrb[0].mxu0
        %v919 = vadd.f32 0.0, %v918
        %v920 = vpop.f32.mrb[0].mxu0
        %921 = vmatprep.mubr.f32.mxu0 0.0
        %922 = vmatmul.mubr.f32.gmra.mrb[0].mxu0 %v748
        %v923 = vpop.f32.mrb[0].mxu0
        %v924 = vadd.f32 0.0, %v923
        %v925 = vpop.f32.mrb[0].mxu0
        %926 = vmatprep.mubr.f32.mxu0 0.0
        %927 = vmatmul.mubr.f32.gmra.mrb[0].mxu0 %v751
        %v928 = vpop.f32.mrb[0].mxu0
        %v929 = vadd.f32 0.0, %v928
        %v930 = vpop.f32.mrb[0].mxu0
        %931 = vmatprep.mubr.f32.mxu0 0.0
        %932 = vmatmul.mubr.f32.gmra.mrb[0].mxu0 %v754
        %v933 = vpop.f32.mrb[0].mxu0
        %v934 = vadd.f32 0.0, %v933
        %v935 = vpop.f32.mrb[0].mxu0
        %936 = vmatprep.mubr.f32.mxu0 0.0
        %937 = vmatmul.mubr.f32.gmra.mrb[0].mxu0 %v757
        %v938 = vpop.f32.mrb[0].mxu0
        %v939 = vadd.f32 0.0, %v938
        %v940 = vpop.f32.mrb[0].mxu0
        %941 = vmatprep.mubr.f32.mxu0 0.0
        %942 = vmatmul.mubr.f32.gmra.mrb[0].mxu0 %v760
        %v943 = vpop.f32.mrb[0].mxu0
        %v944 = vadd.f32 0.0, %v943
        %v945 = vpop.f32.mrb[0].mxu0
        %946 = vmatprep.mubr.f32.mxu0 0.0
        %947 = vmatmul.mubr.f32.gmra.mrb[0].mxu0 %v763
        %v948 = vpop.f32.mrb[0].mxu0
        %v949 = vadd.f32 0.0, %v948
        %v950 = vpop.f32.mrb[0].mxu0
        %951 = vmatprep.mubr.f32.mxu0 0.0
        %952 = vmatmul.mubr.f32.gmra.mrb[0].mxu0 %v766
        %v953 = vpop.f32.mrb[0].mxu0
        %v954 = vadd.f32 0.0, %v953
        %v955 = vpop.f32.mrb[0].mxu0
        %956 = vmatprep.mubr.f32.mxu0 0.0
        %957 = vmatmul.mubr.f32.gmra.mrb[0].mxu0 %v769
        %v958 = vpop.f32.mrb[0].mxu0
        %v959 = vadd.f32 0.0, %v958
        %v960 = vpop.f32.mrb[0].mxu0
        %961 = vmatprep.mubr.f32.mxu0 0.0
        %962 = vmatmul.mubr.f32.gmra.mrb[0].mxu0 %v772
        %v963 = vpop.f32.mrb[0].mxu0
        %v964 = vadd.f32 0.0, %v963
        %v965 = vpop.f32.mrb[0].mxu0
        %966 = vmatprep.mubr.f32.mxu0 0.0
        %967 = vmatmul.mubr.f32.gmra.mrb[0].mxu0 %v775
        %v968 = vpop.f32.mrb[0].mxu0
        %v969 = vadd.f32 0.0, %v968
        %v970 = vpop.f32.mrb[0].mxu0
        %971 = vmatprep.mubr.f32.mxu0 0.0
        %972 = vmatmul.mubr.f32.gmra.mrb[0].mxu0 %v778
        %v973 = vpop.f32.mrb[0].mxu0
        %v974 = vadd.f32 0.0, %v973
        %v975 = vpop.f32.mrb[0].mxu0
        %976 = vmatprep.mubr.f32.mxu0 0.0
        %977 = vmatmul.mubr.f32.gmra.mrb[0].mxu0 %v781
        %v978 = vpop.f32.mrb[0].mxu0
        %v979 = vadd.f32 0.0, %v978
        %v980 = vpop.f32.mrb[0].mxu0
        %981 = vmatprep.mubr.f32.mxu0 0.0
        %982 = vmatmul.mubr.f32.gmra.mrb[0].mxu0 %v784
        %v983 = vpop.f32.mrb[0].mxu0
        %v984 = vadd.f32 0.0, %v983
        %v985 = vpop.f32.mrb[0].mxu0
        %986 = vmatprep.mubr.f32.mxu0 0.0
        %987 = vmatmul.mubr.f32.gmra.mrb[0].mxu0 %v787
        %v988 = vpop.f32.mrb[0].mxu0
        %v989 = vadd.f32 0.0, %v988
        %v990 = vpop.f32.mrb[0].mxu0
        %991 = vmatprep.mubr.f32.mxu0 0.0
        %992 = vmatmul.mubr.f32.gmra.mrb[0].mxu0 %v790
        %v993 = vpop.f32.mrb[0].mxu0
        %v994 = vadd.f32 0.0, %v993
        %v995 = vpop.f32.mrb[0].mxu0
        %996 = vmatprep.mubr.f32.mxu0 0.0
        %997 = vmatmul.mubr.f32.gmra.mrb[0].mxu0 %v793
        %v998 = vpop.f32.mrb[0].mxu0
        %v999 = vadd.f32 0.0, %v998
        %v1000 = vpop.f32.mrb[0].mxu0
        %1001 = vmatprep.mubr.f32.mxu0 0.0
        %1002 = vmatmul.mubr.f32.gmra.mrb[0].mxu0 %v796
        %v1003 = vpop.f32.mrb[0].mxu0
        %v1004 = vadd.f32 0.0, %v1003
        %v1005 = vpop.f32.mrb[0].mxu0
        %1006 = vmatprep.mubr.f32.mxu0 0.0
        %1007 = vmatmul.mubr.f32.gmra.mrb[0].mxu0 %v799
        %v1008 = vpop.f32.mrb[0].mxu0
        %v1009 = vadd.f32 0.0, %v1008
        %v1010 = vpop.f32.mrb[0].mxu0
        %1011 = vmatprep.mubr.f32.mxu0 0.0
        %1012 = vmatmul.mubr.f32.gmra.mrb[0].mxu0 %v802
        %v1013 = vpop.f32.mrb[0].mxu0
        %v1014 = vadd.f32 0.0, %v1013
        %v1015 = vpop.f32.mrb[0].mxu0
        %1016 = vmatprep.mubr.f32.mxu0 0.0
        %1017 = vmatmul.mubr.f32.gmra.mrb[0].mxu0 %v805
        %v1018 = vpop.f32.mrb[0].mxu0
        %v1019 = vadd.f32 0.0, %v1018
        %v1020 = vpop.f32.mrb[0].mxu0
        %1021 = vmatprep.mubr.f32.mxu0 0.0
        %1022 = vmatmul.mubr.f32.gmra.mrb[0].mxu0 %v808
        %v1023 = vpop.f32.mrb[0].mxu0
        %v1024 = vadd.f32 0.0, %v1023
        %v1025 = vpop.f32.mrb[0].mxu0
        %1026 = vmatprep.mubr.f32.mxu0 0.0
        %1027 = vmatmul.mubr.f32.gmra.mrb[0].mxu0 %v811
        %v1028 = vpop.f32.mrb[0].mxu0
        %v1029 = vadd.f32 0.0, %v1028
        %v1030 = vpop.f32.mrb[0].mxu0
        %1031 = vmatprep.mubr.f32.mxu0 0.0
        %1032 = vmatmul.mubr.f32.gmra.mrb[0].mxu0 %v814
        %v1033 = vpop.f32.mrb[0].mxu0
        %v1034 = vadd.f32 0.0, %v1033
        %v1035 = vpop.f32.mrb[0].mxu0
        %1036 = vmatprep.mubr.f32.mxu0 0.0
        %1037 = vmatmul.mubr.f32.gmra.mrb[0].mxu0 %v817
        %v1038 = vpop.f32.mrb[0].mxu0
        %v1039 = vadd.f32 0.0, %v1038
        %v1040 = vpop.f32.mrb[0].mxu0
        %1041 = vmatprep.mubr.f32.mxu0 0.0
        %1042 = vmatmul.mubr.f32.gmra.mrb[0].mxu0 %v820
        %v1043 = vpop.f32.mrb[0].mxu0
        %v1044 = vadd.f32 0.0, %v1043
        %v1045 = vpop.f32.mrb[0].mxu0
        %1046 = vdwg.mxu0
        %v1047 = vmul.f32 %v889, 0.2
        %v1048 = vmul.f32 %v894, 0.2
        %v1049 = vmul.f32 %v899, 0.2
        %v1050 = vmul.f32 %v904, 0.2
        %v1051 = vmul.f32 %v909, 0.2
        %v1052 = vmul.f32 %v914, 0.2
        %v1053 = vmul.f32 %v919, 0.2
        %v1054 = vmul.f32 %v924, 0.2
        %v1055 = vmul.f32 %v929, 0.2
        %v1056 = vmul.f32 %v934, 0.2
        %v1057 = vmul.f32 %v939, 0.2
        %v1058 = vmul.f32 %v944, 0.2
        %v1059 = vmul.f32 %v949, 0.2
        %v1060 = vmul.f32 %v954, 0.2
        %v1061 = vmul.f32 %v959, 0.2
        %v1062 = vmul.f32 %v964, 0.2
        %v1063 = vmul.f32 %v969, 0.2
        %v1064 = vmul.f32 %v974, 0.2
        %v1065 = vmul.f32 %v979, 0.2
        %v1066 = vmul.f32 %v984, 0.2
        %v1067 = vmul.f32 %v989, 0.2
        %v1068 = vmul.f32 %v994, 0.2
        %v1069 = vmul.f32 %v999, 0.2
        %v1070 = vmul.f32 %v1004, 0.2
        %v1071 = vmul.f32 %v1009, 0.2
        %v1072 = vmul.f32 %v1014, 0.2
        %v1073 = vmul.f32 %v1019, 0.2
        %v1074 = vmul.f32 %v1024, 0.2
        %v1075 = vmul.f32 %v1029, 0.2
        %v1076 = vmul.f32 %v1034, 0.2
        %v1077 = vmul.f32 %v1039, 0.2
        %v1078 = vmul.f32 %v1044, 0.2
        %v1079 = vmax.f32 %v889, %v1047
        %v1080 = vmax.f32 %v894, %v1048
        %v1081 = vmax.f32 %v899, %v1049
        %v1082 = vmax.f32 %v904, %v1050
        %v1083 = vmax.f32 %v909, %v1051
        %v1084 = vmax.f32 %v914, %v1052
        %v1085 = vmax.f32 %v919, %v1053
        %v1086 = vmax.f32 %v924, %v1054
        %v1087 = vmax.f32 %v929, %v1055
        %v1088 = vmax.f32 %v934, %v1056
        %v1089 = vmax.f32 %v939, %v1057
        %v1090 = vmax.f32 %v944, %v1058
        %v1091 = vmax.f32 %v949, %v1059
        %v1092 = vmax.f32 %v954, %v1060
        %v1093 = vmax.f32 %v959, %v1061
        %v1094 = vmax.f32 %v964, %v1062
        %v1095 = vmax.f32 %v969, %v1063
        %v1096 = vmax.f32 %v974, %v1064
        %v1097 = vmax.f32 %v979, %v1065
        %v1098 = vmax.f32 %v984, %v1066
        %v1099 = vmax.f32 %v989, %v1067
        %v1100 = vmax.f32 %v994, %v1068
        %v1101 = vmax.f32 %v999, %v1069
        %v1102 = vmax.f32 %v1004, %v1070
        %v1103 = vmax.f32 %v1009, %v1071
        %v1104 = vmax.f32 %v1014, %v1072
        %v1105 = vmax.f32 %v1019, %v1073
        %v1106 = vmax.f32 %v1024, %v1074
        %v1107 = vmax.f32 %v1029, %v1075
        %v1108 = vmax.f32 %v1034, %v1076
        %v1109 = vmax.f32 %v1039, %v1077
        %v1110 = vmax.f32 %v1044, %v1078
        %1111 = vst.msk [vmem:[%s136] sm:$0xff] %vm725, %v1079
        %1112 = vst.msk [vmem:[%s136 + $0x8] sm:$0xff] %vm725, %v1080
        %1113 = vst.msk [vmem:[%s136 + $0x10] sm:$0xff] %vm725, %v1081
        %1114 = vst.msk [vmem:[%s136 + $0x18] sm:$0xff] %vm725, %v1082
        %1115 = vst.msk [vmem:[%s136 + $0x20] sm:$0xff] %vm725, %v1083
        %1116 = vst.msk [vmem:[%s136 + $0x28] sm:$0xff] %vm725, %v1084
        %1117 = vst.msk [vmem:[%s136 + $0x30] sm:$0xff] %vm725, %v1085
        %1118 = vst.msk [vmem:[%s136 + $0x38] sm:$0xff] %vm725, %v1086
        %1119 = vst.msk [vmem:[%s136 + $0x40] sm:$0xff] %vm725, %v1087
        %1120 = vst.msk [vmem:[%s136 + $0x48] sm:$0xff] %vm725, %v1088
        %1121 = vst.msk [vmem:[%s136 + $0x50] sm:$0xff] %vm725, %v1089
        %1122 = vst.msk [vmem:[%s136 + $0x58] sm:$0xff] %vm725, %v1090
        %1123 = vst.msk [vmem:[%s136 + $0x60] sm:$0xff] %vm725, %v1091
        %1124 = vst.msk [vmem:[%s136 + $0x68] sm:$0xff] %vm725, %v1092
        %1125 = vst.msk [vmem:[%s136 + $0x70] sm:$0xff] %vm725, %v1093
        %1126 = vst.msk [vmem:[%s136 + $0x78] sm:$0xff] %vm725, %v1094
        %1127 = vst.msk [vmem:[%s136 + $0x80] sm:$0xff] %vm725, %v1095
        %1128 = vst.msk [vmem:[%s136 + $0x88] sm:$0xff] %vm725, %v1096
        %1129 = vst.msk [vmem:[%s136 + $0x90] sm:$0xff] %vm725, %v1097
        %1130 = vst.msk [vmem:[%s136 + $0x98] sm:$0xff] %vm725, %v1098
        %1131 = vst.msk [vmem:[%s136 + $0xa0] sm:$0xff] %vm725, %v1099
        %1132 = vst.msk [vmem:[%s136 + $0xa8] sm:$0xff] %vm725, %v1100
        %1133 = vst.msk [vmem:[%s136 + $0xb0] sm:$0xff] %vm725, %v1101
        %1134 = vst.msk [vmem:[%s136 + $0xb8] sm:$0xff] %vm725, %v1102
        %1135 = vst.msk [vmem:[%s136 + $0xc0] sm:$0xff] %vm725, %v1103
        %1136 = vst.msk [vmem:[%s136 + $0xc8] sm:$0xff] %vm725, %v1104
        %1137 = vst.msk [vmem:[%s136 + $0xd0] sm:$0xff] %vm725, %v1105
        %1138 = vst.msk [vmem:[%s136 + $0xd8] sm:$0xff] %vm725, %v1106
        %1139 = vst.msk [vmem:[%s136 + $0xe0] sm:$0xff] %vm725, %v1107
        %1140 = vst.msk [vmem:[%s136 + $0xe8] sm:$0xff] %vm725, %v1108
        %1141 = vst.msk [vmem:[%s136 + $0xf0] sm:$0xff] %vm725, %v1109
        %1142 = vst.msk [vmem:[%s136 + $0xf8] sm:$0xff] %vm725, %v1110
        %s1143 = sand.u32 %s71, 1
        %s1144 = scalar_lea.sflag [#allocation3], %s1143
        %s1145 = sand.u32 %s71, 1
        %s1146 = smul.addr %s1145, 256
        %s1147 = scalar_lea.vmem [#allocation2], %s1146
        // Predicated region
        $region29: #{tpu_custom_call.1} parent=27 // pred_check
          %p1148 = pneg %p81
        $region30: #{tpu_custom_call.1} parent=27 // pred_check_branch
          %1150 = sbr.rel (%p1148) target = $region32
        $region31: #{tpu_custom_call.1} parent=27 // pred_region
          %s1152 = ssub.s32 4096, 4096
          %1153 = vsyncadd %s1144, %s1152
          %s1154 = smul.addr %s16, 32
          %s1155 = smul.addr %s1154, 128
          %s1156 = scalar_lea.hbm %s2, %s1155
          %s1157 = sshll.u32 %s1147, 4
          %s1158 = int_to_ptr.vmem [resolvable:$true] %s1157
          %1163 = dma.vmem_to_hbm [thread:$0]  %s1158, 4096, %s1156, %s1144, 128, 128, 8
        $region32: #{tpu_custom_call.1} parent=27 // pred_fallthru
          _
      $region28: #{tpu_custom_call.1} parent=5 // pred_fallthru
        _
      %p1164 = scmp.le.s32.totalorder 2, %s11
      // Predicated region
      $region33: #{tpu_custom_call.1} parent=5 // pred_check
        %p1165 = pneg %p1164
      $region34: #{tpu_custom_call.1} parent=5 // pred_check_branch
        %1167 = sbr.rel (%p1165) target = $region36
      $region35: #{tpu_custom_call.1} parent=5 // pred_region
        %s1168 = ssub.s32 %s11, 2
        // Predicated region
        $region37: #{tpu_custom_call.1} parent=35 // pred_check
          %p1169 = pneg %p87
        $region38: #{tpu_custom_call.1} parent=35 // pred_check_branch
          %1171 = sbr.rel (%p1169) target = $region40
        $region39: #{tpu_custom_call.1} parent=35 // pred_region
          %s1172 = sand.u32 %s72, 1
          %s1173 = scalar_lea.sflag [#allocation3], %s1172
          %s1174 = sand.u32 %s72, 1
          %s1175 = smul.addr %s1174, 256
          %s1176 = scalar_lea.vmem [#allocation2], %s1175
          %1177 = dma.done %s1173, 4096
        $region40: #{tpu_custom_call.1} parent=35 // pred_fallthru
          _
      $region36: #{tpu_custom_call.1} parent=5 // pred_fallthru
        _
    $region6: #{tpu_custom_call.1} parent=1 // loop_footer
      %s15 = sadd.s32 1, %s11
    $region7: #{tpu_custom_call.1} parent=1 // loop_footer_branch
      %10 = sbr.rel target = $region3
    $region8: #{tpu_custom_call.1} parent=1 // loop_exit
      _
    %1178 = vsyncpa [#allocation3], 1
    %s1179 = scalar_lea.sflag [#allocation3], 1
    %1180 = vsyncpa %s1179, 1

</llo_original>
